<compile_context>
chip_gen: v7x
topology: tpu7x:2x2x1
jax: 0.10.0
libtpu: 0.0.40
codegen_flags: <defaults>
</compile_context>

<pallas_src>
import functools

import jax
import jax.numpy as jnp
from jax.experimental import pallas as pl
from jax.experimental.pallas import tpu as pltpu

_LANES = 128       # vreg lane width
_SUBLANES = 8      # f32 vreg sublane depth (accumulator shape)


def _sublane_multiple(dtype):
    itemsize = jnp.dtype(dtype).itemsize
    if itemsize >= 4:
        return 8
    if itemsize == 2:
        return 16
    return 32


# ------------------------------ Pallas kernel -------------------------------

def _l1_log_kernel(nrows_ref, x_ref, y_ref, o_ref, acc_ref, *, steps, tm):
    p = pl.program_id(0)          # parallel slice (megacore on v7x)
    s = pl.program_id(1)          # reduction step within the slice

    @pl.when(s == 0)
    def _():
        acc_ref[...] = jnp.zeros_like(acc_ref)

    # Mask rows beyond the true row count (ragged last block / grid
    # over-coverage).  Masked slots become 1.0 before the log, so they
    # contribute exactly 0 and garbage in padded reads never propagates.
    row0 = (p * steps + s) * tm
    row_ids = jax.lax.broadcasted_iota(jnp.int32, (tm, _LANES), 0) + row0
    valid = row_ids < nrows_ref[0]

    x = jnp.where(valid, x_ref[...].astype(jnp.float32), 1.0)
    y = jnp.where(valid, y_ref[...].astype(jnp.float32), 1.0)
    d = jnp.abs(jnp.log(x) - jnp.log(y))          # EUP logs + VPU sub/abs

    # Fold the (tm, 128) tile onto the (8, 128) accumulator with pure VPU
    # adds; tm is a multiple of 8 so the reshape never crosses a vreg tile.
    acc_ref[...] += jnp.sum(
        d.reshape(tm // _SUBLANES, _SUBLANES, _LANES), axis=0)

    @pl.when(s == steps - 1)
    def _():
        # Lane-dense (8,128) partial-sum store, once per slice.  The tiny
        # cross-lane reduction + 1/N scale happen in the wrapper.
        o_ref[...] = acc_ref[...]


# --------------------------------- wrapper ----------------------------------

def l1_log_loss(inpt, target, *, tm_max=1024):
    """mean(|log(inpt) - log(target)|) over all elements (nn.L1Loss default)."""
    assert inpt.shape == target.shape, (inpt.shape, target.shape)
    n = int(inpt.size)
    assert n > 0

    x = inpt.reshape(-1)
    y = target.reshape(-1)

    # Lane padding only (<=127 elements) so the free row-major reshape to
    # (rows, 128) is legal.  128-aligned sizes take a zero-copy path.
    # TODO(synk): a fully copy-free ragged tail would need manual DMA of the
    # flat array; the pad value 1.0 keeps log(1)-log(1)=0 semantics.
    rem = n % _LANES
    if rem:
        pad = _LANES - rem
        x = jnp.concatenate([x, jnp.ones((pad,), x.dtype)])
        y = jnp.concatenate([y, jnp.ones((pad,), y.dtype)])
    rows = (n + _LANES - 1) // _LANES
    x2 = x.reshape(rows, _LANES)
    y2 = y.reshape(rows, _LANES)

    # Tile rows; round to the dtype's packed-sublane multiple.
    sub = max(_sublane_multiple(x2.dtype), _sublane_multiple(y2.dtype))
    assert tm_max % sub == 0, (tm_max, sub)
    tm = min(tm_max, ((rows + sub - 1) // sub) * sub)
    blocks = -(-rows // tm)
    num_slices = 2 if blocks >= 2 else 1      # one slice per TC on v7x
    steps = -(-blocks // num_slices)
    last_block = blocks - 1                   # clamp grid over-coverage

    in_map = lambda p, s, nr: (jnp.minimum(p * steps + s, last_block), 0)
    out_map = lambda p, s, nr: (p, 0)

    nrows = jnp.array([rows], dtype=jnp.int32)
    kernel = functools.partial(_l1_log_kernel, steps=steps, tm=tm)

    itemsize = jnp.dtype(inpt.dtype).itemsize
    total = num_slices * steps * tm * _LANES
    cost = pl.CostEstimate(
        flops=6 * total,                        # where/sub/abs/accumulate
        transcendentals=2 * total,              # two logs per element
        bytes_accessed=2 * rows * _LANES * itemsize
        + num_slices * _SUBLANES * _LANES * 4,
    )

    partials = pl.pallas_call(
        kernel,
        out_shape=jax.ShapeDtypeStruct((num_slices * _SUBLANES, _LANES),
                                       jnp.float32),
        grid_spec=pltpu.PrefetchScalarGridSpec(
            num_scalar_prefetch=1,              # true row count in SMEM
            grid=(num_slices, steps),
            in_specs=[
                pl.BlockSpec((tm, _LANES), in_map),
                pl.BlockSpec((tm, _LANES), in_map),
            ],
            out_specs=pl.BlockSpec((_SUBLANES, _LANES), out_map),
            scratch_shapes=[pltpu.VMEM((_SUBLANES, _LANES), jnp.float32)],
        ),
        compiler_params=pltpu.CompilerParams(
            dimension_semantics=("parallel", "arbitrary"),
        ),
        cost_estimate=cost,
    )(nrows, x2, y2)

    # Tiny final reduce + mean scale (256/2048 f32 elements) in plain XLA.
    return jnp.sum(partials) / n


# ----------------------------- pure-JAX reference ---------------------------

def l1_log_reference(inpt, target):
    return jnp.mean(jnp.abs(jnp.log(inpt) - jnp.log(target)))


# ----------------------------------- main ------------------------------------

if __name__ == "__main__":
    key = jax.random.PRNGKey(0)
    kx, ky, ka, kb = jax.random.split(key, 4)

    # Strictly positive inputs (log is only meaningful there), NCHW-like shape.
    x = jax.random.uniform(kx, (2, 4, 16, 16), jnp.float32, 0.1, 2.0)
    y = jax.random.uniform(ky, (2, 4, 16, 16), jnp.float32, 0.1, 2.0)

    loss = jax.jit(l1_log_loss)(x, y)
    jax.block_until_ready(loss)
    ref = l1_log_reference(x, y)
    rel = abs(float(loss) - float(ref)) / (abs(float(ref)) + 1e-12)
    assert rel < 1e-5, (float(loss), float(ref), rel)

    # Ragged / non-128-aligned size exercises the masking + lane-pad path.
    a = jax.random.uniform(ka, (3, 5, 7), jnp.float32, 0.1, 2.0)
    b = jax.random.uniform(kb, (3, 5, 7), jnp.float32, 0.1, 2.0)
    loss2 = jax.jit(l1_log_loss)(a, b)
    jax.block_until_ready(loss2)
    ref2 = l1_log_reference(a, b)
    rel2 = abs(float(loss2) - float(ref2)) / (abs(float(ref2)) + 1e-12)
    assert rel2 < 1e-5, (float(loss2), float(ref2), rel2)

    print("KERNEL_OK")
</pallas_src>

<mosaic_0001>
module attributes {stable_mosaic.version = 11 : i64} {
  func.func @_l1_log_kernel(%arg0: i32, %arg1: i32, %arg2: memref<1xi32, #tpu.memory_space<smem>>, %arg3: memref<16x128xf32, #tpu.memory_space<vmem>>, %arg4: memref<16x128xf32, #tpu.memory_space<vmem>>, %arg5: memref<8x128xf32, #tpu.memory_space<vmem>>, %arg6: memref<8x128xf32, #tpu.memory_space<vmem>>) attributes {dimension_semantics = [#tpu.dimension_semantics<parallel>, #tpu.dimension_semantics<arbitrary>], iteration_bounds = array<i64: 1, 1>, scalar_prefetch = 1 : i64, scratch_operands = 1 : i64, tpu.core_type = #tpu.core_type<tc>, window_params = [{transform_indices = @transform_0, window_bounds = array<i64: 16, 128>}, {transform_indices = @transform_1, window_bounds = array<i64: 16, 128>}, {transform_indices = @transform_2, window_bounds = array<i64: 8, 128>}]} {
    %c0_i32 = arith.constant 0 : i32
    %0 = arith.cmpi eq, %arg1, %c0_i32 : i32
    %1 = arith.extui %0 : i1 to i32
    %c0_i32_0 = arith.constant 0 : i32
    %2 = arith.cmpi ne, %1, %c0_i32_0 : i32
    scf.if %2 {
      %cst_13 = arith.constant 0.000000e+00 : f32
      %30 = vector.broadcast %cst_13 : f32 to vector<8x128xf32>
      %c0_14 = arith.constant 0 : index
      %c0_15 = arith.constant 0 : index
      %31 = vector.load %arg6[%c0_14, %c0_15] : memref<8x128xf32, #tpu.memory_space<vmem>>, vector<8x128xf32>
      tpu.vector_store %arg6[%c0_14, %c0_15], %30 {strides = array<i32>} : memref<8x128xf32, #tpu.memory_space<vmem>>, vector<8x128xf32>,
    } else {
    }
    %c1_i32 = arith.constant 1 : i32
    %3 = arith.muli %arg0, %c1_i32 : i32
    %4 = arith.addi %3, %arg1 : i32
    %c16_i32 = arith.constant 16 : i32
    %5 = arith.muli %4, %c16_i32 : i32
    %6 = tpu.iota {dimensions = array<i32: 0>} : vector<16x128xi32>
    %7 = vector.broadcast %5 : i32 to vector<16x128xi32>
    %8 = arith.addi %6, %7 : vector<16x128xi32>
    %c0 = arith.constant 0 : index
    %9 = memref.load %arg2[%c0] : memref<1xi32, #tpu.memory_space<smem>>
    %10 = vector.broadcast %9 : i32 to vector<16x128xi32>
    %11 = arith.cmpi slt, %8, %10 : vector<16x128xi32>
    %c0_1 = arith.constant 0 : index
    %c0_2 = arith.constant 0 : index
    %12 = vector.load %arg3[%c0_1, %c0_2] : memref<16x128xf32, #tpu.memory_space<vmem>>, vector<16x128xf32>
    %cst = arith.constant 1.000000e+00 : f32
    %13 = vector.broadcast %cst : f32 to vector<16x128xf32>
    %14 = arith.select %11, %12, %13 : vector<16x128xi1>, vector<16x128xf32>
    %c0_3 = arith.constant 0 : index
    %c0_4 = arith.constant 0 : index
    %15 = vector.load %arg4[%c0_3, %c0_4] : memref<16x128xf32, #tpu.memory_space<vmem>>, vector<16x128xf32>
    %cst_5 = arith.constant 1.000000e+00 : f32
    %16 = vector.broadcast %cst_5 : f32 to vector<16x128xf32>
    %17 = arith.select %11, %15, %16 : vector<16x128xi1>, vector<16x128xf32>
    %18 = math.log %14 : vector<16x128xf32>
    %19 = math.log %17 : vector<16x128xf32>
    %20 = arith.subf %18, %19 : vector<16x128xf32>
    %21 = math.absf %20 : vector<16x128xf32>
    %c0_6 = arith.constant 0 : index
    %c0_7 = arith.constant 0 : index
    %22 = vector.load %arg6[%c0_6, %c0_7] : memref<8x128xf32, #tpu.memory_space<vmem>>, vector<8x128xf32>
    %23 = vector.shape_cast %21 : vector<16x128xf32> to vector<2x8x128xf32>
    %cst_8 = arith.constant dense<0.000000e+00> : vector<8x128xf32>
    %24 = vector.multi_reduction <add>, %23, %cst_8 [0] : vector<2x8x128xf32> to vector<8x128xf32>
    %25 = arith.addf %22, %24 : vector<8x128xf32>
    %c0_9 = arith.constant 0 : index
    %c0_10 = arith.constant 0 : index
    %26 = vector.load %arg6[%c0_9, %c0_10] : memref<8x128xf32, #tpu.memory_space<vmem>>, vector<8x128xf32>
    tpu.vector_store %arg6[%c0_9, %c0_10], %25 {strides = array<i32>} : memref<8x128xf32, #tpu.memory_space<vmem>>, vector<8x128xf32>,
    %c0_i32_11 = arith.constant 0 : i32
    %27 = arith.cmpi eq, %arg1, %c0_i32_11 : i32
    %28 = arith.extui %27 : i1 to i32
    %c0_i32_12 = arith.constant 0 : i32
    %29 = arith.cmpi ne, %28, %c0_i32_12 : i32
    scf.if %29 {
      %c0_13 = arith.constant 0 : index
      %c0_14 = arith.constant 0 : index
      %30 = vector.load %arg6[%c0_13, %c0_14] : memref<8x128xf32, #tpu.memory_space<vmem>>, vector<8x128xf32>
      %c0_15 = arith.constant 0 : index
      %c0_16 = arith.constant 0 : index
      %31 = vector.load %arg5[%c0_15, %c0_16] : memref<8x128xf32, #tpu.memory_space<vmem>>, vector<8x128xf32>
      tpu.vector_store %arg5[%c0_15, %c0_16], %30 {strides = array<i32>} : memref<8x128xf32, #tpu.memory_space<vmem>>, vector<8x128xf32>,
    } else {
    }
    return
  }
  func.func @transform_0(%arg0: i32, %arg1: i32, %arg2: memref<1xi32, #tpu.memory_space<smem>>) -> (i32, i32) {
    %c1_i32 = arith.constant 1 : i32
    %0 = arith.muli %arg0, %c1_i32 : i32
    %1 = arith.addi %0, %arg1 : i32
    %c0_i32 = arith.constant 0 : i32
    %2 = arith.minsi %1, %c0_i32 : i32
    %c0_i32_0 = arith.constant 0 : i32
    %c0_i32_1 = arith.constant 0 : i32
    return %2, %c0_i32_0 : i32, i32
  }
  func.func @transform_1(%arg0: i32, %arg1: i32, %arg2: memref<1xi32, #tpu.memory_space<smem>>) -> (i32, i32) {
    %c1_i32 = arith.constant 1 : i32
    %0 = arith.muli %arg0, %c1_i32 : i32
    %1 = arith.addi %0, %arg1 : i32
    %c0_i32 = arith.constant 0 : i32
    %2 = arith.minsi %1, %c0_i32 : i32
    %c0_i32_0 = arith.constant 0 : i32
    %c0_i32_1 = arith.constant 0 : i32
    return %2, %c0_i32_0 : i32, i32
  }
  func.func @transform_2(%arg0: i32, %arg1: i32, %arg2: memref<1xi32, #tpu.memory_space<smem>>) -> (i32, i32) {
    %c0_i32 = arith.constant 0 : i32
    %c0_i32_0 = arith.constant 0 : i32
    return %arg0, %c0_i32 : i32, i32
  }
}

</mosaic_0001>

<llo_original>
// kernel: l1_log_loss.1
$region0: #{l1_log_loss.1}
  #allocation0 [shape = 'u32[]', space=smem, size = 0x4, offset = 0x4, fixed_abs, tag = 'smem constant byte address 0x4 - core index']
  #allocation1 [shape = 'u32[144,128]{1,0:T(1,128)}', space=vmem, size = 0x12000, scoped, tag = 'internal scratch']
  #allocation2 [shape = 'f32[8,128]{1,0:T(8,128)}', space=vmem, size = 0x1000, scoped, tag = 'scratch operand']
  #allocation3 [shape = 's32[1]{0}', space=sflag, size = 0x4, scoped, tag = 'scoped memory for l1_log_loss.1']
  #allocation4 [shape = 's32[1]{0:T(128)S(6)}', space=smem, size = 0x200, scoped, tag = 'prefetched SMEM operand 0']
  %s0 = inlined_call_operand.<no memory space> [shape: s32[1], index: 0, kind: input, shape index: {}]
  %s1 = inlined_call_operand.vmem [shape: f32[16,128], index: 1, kind: input, shape index: {}]
  %s2 = inlined_call_operand.vmem [shape: f32[16,128], index: 2, kind: input, shape index: {}]
  %s3 = inlined_call_operand.vmem [shape: f32[8,128], index: 3, kind: output, shape index: {}]
  %s4 = sld [smem:[#allocation0]]
  $region26: #{l1_log_loss.1} parent=0
    _
  %s6 = ssub.s32 1, %s4
  %s7 = scalar_select 0, %s6, %s4
  %8 = sst [smem:[#allocation4]] %s0
  // Predicated region
  $region2: #{l1_log_loss.1} parent=0 // pred_check
    _
  $region3: #{l1_log_loss.1} parent=0 // pred_check_branch
    %10 = sbr.rel (0) target = $region5
  $region4: #{l1_log_loss.1} parent=0 // pred_region
    %s11 = sadd.s32 0, 0
    %p12 = scmp.lt.s32.totalorder %s11, 0
    %s13 = scalar_select %p12, %s11, 0
    %s14 = smul.u32 2, %s13
    %p15 = scmp.lt.s32.totalorder %s14, 1
    %s16 = scalar_select %p15, %s14, 1
    %s17 = smul.addr %s16, 8
    %s18 = scalar_lea.vmem %s1, %s17
    %s19 = sadd.s32 0, 0
    %p20 = scmp.lt.s32.totalorder %s19, 0
    %s21 = scalar_select %p20, %s19, 0
    %s22 = smul.u32 2, %s21
  $region5: #{l1_log_loss.1} parent=0 // pred_fallthru
    _
  // Predicated region
  $region6: #{l1_log_loss.1} parent=0 // pred_check
    _
  $region7: #{l1_log_loss.1} parent=0 // pred_check_branch
    %24 = sbr.rel (0) target = $region9
  $region8: #{l1_log_loss.1} parent=0 // pred_region
    %s25 = sadd.s32 0, 0
    %p26 = scmp.lt.s32.totalorder %s25, 0
    %s27 = scalar_select %p26, %s25, 0
    %s28 = smul.u32 2, %s27
    %p29 = scmp.lt.s32.totalorder %s28, 1
    %s30 = scalar_select %p29, %s28, 1
    %s31 = smul.addr %s30, 8
    %s32 = scalar_lea.vmem %s2, %s31
    %s33 = sadd.s32 0, 0
    %p34 = scmp.lt.s32.totalorder %s33, 0
    %s35 = scalar_select %p34, %s33, 0
    %s36 = smul.u32 2, %s35
  $region9: #{l1_log_loss.1} parent=0 // pred_fallthru
    _
  %s37 = sadd.s32 0, 0
  %p38 = scmp.lt.s32.totalorder %s37, 0
  %s39 = scalar_select %p38, %s37, 0
  %s40 = smul.u32 2, %s39
  %p41 = scmp.lt.s32.totalorder %s40, 1
  %s42 = scalar_select %p41, %s40, 1
  %s43 = smul.addr %s42, 8
  %s44 = scalar_lea.vmem %s1, %s43
  %s45 = sadd.s32 0, 0
  %p46 = scmp.lt.s32.totalorder %s45, 0
  %s47 = scalar_select %p46, %s45, 0
  %s48 = smul.u32 2, %s47
  %p49 = scmp.lt.s32.totalorder %s48, 1
  %s50 = scalar_select %p49, %s48, 1
  %s51 = smul.addr %s50, 8
  %s52 = scalar_lea.vmem %s2, %s51
  %s53 = sadd.s32 0, 0
  %p54 = scmp.lt.s32.totalorder %s53, 0
  %s55 = scalar_select %p54, %s53, 0
  %s56 = smul.u32 2, %s55
  %p57 = scmp.lt.s32.totalorder %s56, 1
  %s58 = scalar_select %p57, %s56, 1
  %s59 = smul.addr %s58, 8
  %s60 = scalar_lea.vmem %s1, %s59
  %s61 = sadd.s32 0, 0
  %p62 = scmp.lt.s32.totalorder %s61, 0
  %s63 = scalar_select %p62, %s61, 0
  %s64 = smul.u32 2, %s63
  %s65 = sadd.s32 0, 0
  %p66 = scmp.lt.s32.totalorder %s65, 0
  %s67 = scalar_select %p66, %s65, 0
  %s68 = smul.u32 2, %s67
  %p69 = scmp.lt.s32.totalorder %s68, 1
  %s70 = scalar_select %p69, %s68, 1
  %s71 = smul.addr %s70, 8
  %s72 = scalar_lea.vmem %s2, %s71
  %s73 = sadd.s32 0, 0
  %p74 = scmp.lt.s32.totalorder %s73, 0
  %s75 = scalar_select %p74, %s73, 0
  %s76 = smul.u32 2, %s75
  %p77 = scmp.eq.s32.totalorder 0, 0
  // Predicated region
  $region10: #{l1_log_loss.1} parent=0 // pred_check
    %p78 = pneg %p77
  $region11: #{l1_log_loss.1} parent=0 // pred_check_branch
    %80 = sbr.rel (%p78) target = $region13
  $region12: #{l1_log_loss.1} parent=0 // pred_region
    %81 = vst [vmem:[#allocation2] sm:$0xff] 0.0
  $region13: #{l1_log_loss.1} parent=0 // pred_fallthru
    _
  %s82 = sadd.s32 0, 0
  %s83 = smul.u32 %s82, 16
  %v84 = vlaneseq
  %v85 = vshrl.u32 %v84, 7
  %v86 = vadd.s32 %v85, 8
  %v87 = vstv %s83
  %v88 = vadd.s32 %v85, %v87
  %v89 = vadd.s32 %v86, %v87
  %s90 = sld [smem:[#allocation4]]
  %v91 = vstv %s90
  %vm92 = vcmp.lt.s32.totalorder %v88, %v91
  %vm93 = vcmp.lt.s32.totalorder %v89, %v91
  %v94 = vld [vmem:[%s60] sm:$0xff]
  %v95 = vld [vmem:[%s60 + $0x8] sm:$0xff]
  %v96 = vsel %vm92, %v94, 1.0
  %v97 = vsel %vm93, %v95, 1.0
  %v98 = vld [vmem:[%s72] sm:$0xff]
  %v99 = vld [vmem:[%s72 + $0x8] sm:$0xff]
  %v100 = vsel %vm92, %v98, 1.0
  %v101 = vsel %vm93, %v99, 1.0
  %v102 = vlog2.pop %v96
  %v103 = vmul.f32 %v102, 0.6931472
  %v104 = vlog2.pop %v97
  %v105 = vmul.f32 %v104, 0.6931472
  %v106 = vlog2.pop %v100
  %v107 = vmul.f32 %v106, 0.6931472
  %v108 = vlog2.pop %v101
  %v109 = vmul.f32 %v108, 0.6931472
  %v110 = vsub.f32 %v103, %v107
  %v111 = vsub.f32 %v105, %v109
  %v112 = vand.u32 2147483647, %v110
  %v113 = vand.u32 2147483647, %v111
  %v114 = vld [vmem:[#allocation2] sm:$0xff]
  %v115 = vadd.f32 %v112, %v113
  %v116 = vadd.f32 %v114, %v115
  %117 = vst [vmem:[#allocation2] sm:$0xff] %v116
  // Predicated region
  $region14: #{l1_log_loss.1} parent=0 // pred_check
    %p118 = pneg %p77
  $region15: #{l1_log_loss.1} parent=0 // pred_check_branch
    %120 = sbr.rel (%p118) target = $region17
  $region16: #{l1_log_loss.1} parent=0 // pred_region
    %v121 = vld [vmem:[#allocation2] sm:$0xff]
    %122 = vst [vmem:[%s3] sm:$0xff] %v121
  $region17: #{l1_log_loss.1} parent=0 // pred_fallthru
    _
  // Predicated region
  $region18: #{l1_log_loss.1} parent=0 // pred_check
    _
  $region19: #{l1_log_loss.1} parent=0 // pred_check_branch
    %124 = sbr.rel (0) target = $region21
  $region20: #{l1_log_loss.1} parent=0 // pred_region
    _
  $region21: #{l1_log_loss.1} parent=0 // pred_fallthru
    _
  // Predicated region
  $region22: #{l1_log_loss.1} parent=0 // pred_check
    _
  $region23: #{l1_log_loss.1} parent=0 // pred_check_branch
    %126 = sbr.rel (0) target = $region25
  $region24: #{l1_log_loss.1} parent=0 // pred_region
    _
  $region25: #{l1_log_loss.1} parent=0 // pred_fallthru
    _

</llo_original>
